<compile_context>
chip_gen: v7x
topology: tpu7x:2x2x1
jax: 0.10.0
libtpu: 0.0.40
codegen_flags: <defaults>
</compile_context>

<pallas_src>
import jax
import jax.numpy as jnp
from jax.experimental import pallas as pl
from jax.experimental.pallas import tpu as pltpu


def fused_kernel(x_ref, lw_ref, lb1_ref, cw_ref, cb_ref, o_ref):
    # x_ref  : (C, Din, H)       VMEM  -- ORIGINAL layout; permute folded into indexing
    # lw_ref : (Dout*Din,)       SMEM  -- linear weight, row-major flat
    # lb1_ref: (Dout,)           SMEM  -- linear bias with the "+1" folded in
    # cw_ref : (Cout*Cin,)       SMEM  -- 1x1 conv weight (squeezed), row-major flat
    # cb_ref : (Cout,)           SMEM  -- conv bias
    # o_ref  : (Cout*Dout, H)    VMEM  -- H stays in lanes; no in-kernel relayout
    C, Din, H = x_ref.shape
    Dout = lb1_ref.shape[0]
    Cout = cb_ref.shape[0]
    Cin = C

    x = x_ref[...]                                   # (C, Din, H), H in lanes

    # ---- Hoist every SMEM scalar read once (no per-term reload/broadcast).
    lw = [[lw_ref[j * Din + f] for f in range(Din)] for j in range(Dout)]
    lb1 = [lb1_ref[j] for j in range(Dout)]
    cw = [[cw_ref[o * Cin + c] for c in range(Cin)] for o in range(Cout)]
    cb = [cb_ref[o] for o in range(Cout)]

    # ---- Linear over axis 1 of the ORIGINAL x (== permute(0,2,1) then linear
    #      on the last dim), "+1" folded into the bias, then ReLU.  Pure VPU FMAs.
    # v4[j][c, h] = relu(sum_f x[c, f, h] * W[j, f] + b[j] + 1)        (C, H)
    v4 = []
    for j in range(Dout):                            # unrolled at trace time (Dout=2)
        acc = x[:, 0, :] * lw[j][0]
        for f in range(1, Din):
            acc = acc + x[:, f, :] * lw[j][f]
        v4.append(jnp.maximum(acc + lb1[j], 0.0))

    # ---- 1x1 conv over the channel dim (unbatched CHW semantics), unrolled.
    # Row (o, j): v5[o, h, j] = sum_c cw[o, c] * v4[j][c, h] + cb[o]
    # Each (1, H) row is stored directly -- no concatenate, no swapaxes/XLU.
    for o in range(Cout):
        for j in range(Dout):
            s = cw[o][0] * v4[j][0:1, :]             # (1, H), stays 2D
            for c in range(1, Cin):
                s = s + cw[o][c] * v4[j][c:c + 1, :]
            row = s + cb[o]                          # (1, H)
            # Keep v5 - v5 so NaN/Inf in x1 propagate exactly like PyTorch.
            r = o * Dout + j
            o_ref[r:r + 1, :] = row - row


def prepare_params(lin_w, lin_b, conv_w, conv_b):
    """One-time parameter prep (constants) -- kept OUT of the jitted forward."""
    lin_w = jnp.asarray(lin_w, jnp.float32)                          # (Dout, Din)
    Dout, Din = lin_w.shape
    Cout, Cin = conv_w.shape[0], conv_w.shape[1]
    lw_flat = lin_w.reshape(Dout * Din)                              # 1D -> tiny SMEM
    lb1 = jnp.asarray(lin_b, jnp.float32) + 1.0                      # fold "+1"
    cw_flat = jnp.asarray(conv_w, jnp.float32).reshape(Cout * Cin)   # squeeze 1x1
    cb = jnp.asarray(conv_b, jnp.float32)                            # (Cout,)
    return lw_flat, lb1, cw_flat, cb


@jax.jit
def model_forward(x1, lw_flat, lb1, cw_flat, cb):
    # No transpose / astype on the input: the permute is folded into the kernel.
    C, Din, H = x1.shape
    Dout = lb1.shape[0]
    Cout = cb.shape[0]

    out2d = pl.pallas_call(
        fused_kernel,
        out_shape=jax.ShapeDtypeStruct((Cout * Dout, H), jnp.float32),
        in_specs=[
            pl.BlockSpec(memory_space=pltpu.MemorySpace.VMEM),   # x1 (whole array)
            pl.BlockSpec(memory_space=pltpu.MemorySpace.SMEM),   # linear weight (flat)
            pl.BlockSpec(memory_space=pltpu.MemorySpace.SMEM),   # linear bias (+1 folded)
            pl.BlockSpec(memory_space=pltpu.MemorySpace.SMEM),   # conv weight (flat)
            pl.BlockSpec(memory_space=pltpu.MemorySpace.SMEM),   # conv bias
        ],
        out_specs=pl.BlockSpec(memory_space=pltpu.MemorySpace.VMEM),
    )(x1, lw_flat, lb1, cw_flat, cb)

    # Kernel stores lane-major (H in lanes).  The tiny (H, Dout) reorder is a
    # wrapper-side XLA op, keeping all XLU/relayout work out of the kernel.
    return out2d.reshape(Cout, Dout, H).transpose(0, 2, 1)      # (Cout, H, Dout)


if __name__ == "__main__":
    key = jax.random.PRNGKey(0)
    k_x, k_lw, k_lb, k_cw, k_cb = jax.random.split(key, 5)

    # Input: (C=2, F=2, H=8) so permute -> (2, 8, 2), Linear(2,2) acts on F,
    # and the unbatched 1x1 Conv2d sees 2 channels (well-defined forward).
    x1 = jax.random.normal(k_x, (2, 2, 8), dtype=jnp.float32)

    # Deterministic PyTorch-style uniform init.
    fan_in_lin = 2
    bound_lin = 1.0 / (fan_in_lin ** 0.5)
    lin_w = jax.random.uniform(k_lw, (2, 2), jnp.float32, -bound_lin, bound_lin)
    lin_b = jax.random.uniform(k_lb, (2,), jnp.float32, -bound_lin, bound_lin)

    fan_in_conv = 2 * 1 * 1
    bound_conv = 1.0 / (fan_in_conv ** 0.5)
    conv_w = jax.random.uniform(k_cw, (2, 2, 1, 1), jnp.float32, -bound_conv, bound_conv)
    conv_b = jax.random.uniform(k_cb, (2,), jnp.float32, -bound_conv, bound_conv)

    params = prepare_params(lin_w, lin_b, conv_w, conv_b)   # one-time, outside jit

    out = model_forward(x1, *params)
    out = jax.block_until_ready(out)

    assert out.shape == (2, 8, 2), out.shape
    assert bool(jnp.all(out == 0.0)), "v5 - v5 must be exactly zero for finite inputs"
    print("KERNEL_OK")
</pallas_src>

<mosaic_0001>
module attributes {stable_mosaic.version = 11 : i64} {
  func.func @fused_kernel(%arg0: memref<2x2x8xf32, #tpu.memory_space<vmem>>, %arg1: memref<4xf32, #tpu.memory_space<smem>>, %arg2: memref<2xf32, #tpu.memory_space<smem>>, %arg3: memref<4xf32, #tpu.memory_space<smem>>, %arg4: memref<2xf32, #tpu.memory_space<smem>>, %arg5: memref<4x8xf32, #tpu.memory_space<vmem>>) attributes {dimension_semantics = [], scalar_prefetch = 0 : i64, scratch_operands = 0 : i64, tpu.core_type = #tpu.core_type<tc>} {
    %c0 = arith.constant 0 : index
    %c0_0 = arith.constant 0 : index
    %c0_1 = arith.constant 0 : index
    %0 = vector.load %arg0[%c0, %c0_0, %c0_1] : memref<2x2x8xf32, #tpu.memory_space<vmem>>, vector<2x2x8xf32>
    %c0_2 = arith.constant 0 : index
    %1 = memref.load %arg1[%c0_2] : memref<4xf32, #tpu.memory_space<smem>>
    %c1 = arith.constant 1 : index
    %2 = memref.load %arg1[%c1] : memref<4xf32, #tpu.memory_space<smem>>
    %c2 = arith.constant 2 : index
    %3 = memref.load %arg1[%c2] : memref<4xf32, #tpu.memory_space<smem>>
    %c3 = arith.constant 3 : index
    %4 = memref.load %arg1[%c3] : memref<4xf32, #tpu.memory_space<smem>>
    %c0_3 = arith.constant 0 : index
    %5 = memref.load %arg2[%c0_3] : memref<2xf32, #tpu.memory_space<smem>>
    %c1_4 = arith.constant 1 : index
    %6 = memref.load %arg2[%c1_4] : memref<2xf32, #tpu.memory_space<smem>>
    %c0_5 = arith.constant 0 : index
    %7 = memref.load %arg3[%c0_5] : memref<4xf32, #tpu.memory_space<smem>>
    %c1_6 = arith.constant 1 : index
    %8 = memref.load %arg3[%c1_6] : memref<4xf32, #tpu.memory_space<smem>>
    %c2_7 = arith.constant 2 : index
    %9 = memref.load %arg3[%c2_7] : memref<4xf32, #tpu.memory_space<smem>>
    %c3_8 = arith.constant 3 : index
    %10 = memref.load %arg3[%c3_8] : memref<4xf32, #tpu.memory_space<smem>>
    %c0_9 = arith.constant 0 : index
    %11 = memref.load %arg4[%c0_9] : memref<2xf32, #tpu.memory_space<smem>>
    %c1_10 = arith.constant 1 : index
    %12 = memref.load %arg4[%c1_10] : memref<2xf32, #tpu.memory_space<smem>>
    %13 = vector.extract_strided_slice %0 {offsets = [0, 0, 0], sizes = [2, 1, 8], strides = [1, 1, 1]} : vector<2x2x8xf32> to vector<2x1x8xf32>
    %14 = vector.shape_cast %13 : vector<2x1x8xf32> to vector<2x8xf32>
    %15 = vector.broadcast %1 : f32 to vector<2x8xf32>
    %16 = arith.mulf %14, %15 : vector<2x8xf32>
    %17 = vector.extract_strided_slice %0 {offsets = [0, 1, 0], sizes = [2, 1, 8], strides = [1, 1, 1]} : vector<2x2x8xf32> to vector<2x1x8xf32>
    %18 = vector.shape_cast %17 : vector<2x1x8xf32> to vector<2x8xf32>
    %19 = vector.broadcast %2 : f32 to vector<2x8xf32>
    %20 = arith.mulf %18, %19 : vector<2x8xf32>
    %21 = arith.addf %16, %20 : vector<2x8xf32>
    %22 = vector.broadcast %5 : f32 to vector<2x8xf32>
    %23 = arith.addf %21, %22 : vector<2x8xf32>
    %cst = arith.constant 0.000000e+00 : f32
    %24 = vector.broadcast %cst : f32 to vector<2x8xf32>
    %25 = arith.maximumf %23, %24 : vector<2x8xf32>
    %26 = vector.extract_strided_slice %0 {offsets = [0, 0, 0], sizes = [2, 1, 8], strides = [1, 1, 1]} : vector<2x2x8xf32> to vector<2x1x8xf32>
    %27 = vector.shape_cast %26 : vector<2x1x8xf32> to vector<2x8xf32>
    %28 = vector.broadcast %3 : f32 to vector<2x8xf32>
    %29 = arith.mulf %27, %28 : vector<2x8xf32>
    %30 = vector.extract_strided_slice %0 {offsets = [0, 1, 0], sizes = [2, 1, 8], strides = [1, 1, 1]} : vector<2x2x8xf32> to vector<2x1x8xf32>
    %31 = vector.shape_cast %30 : vector<2x1x8xf32> to vector<2x8xf32>
    %32 = vector.broadcast %4 : f32 to vector<2x8xf32>
    %33 = arith.mulf %31, %32 : vector<2x8xf32>
    %34 = arith.addf %29, %33 : vector<2x8xf32>
    %35 = vector.broadcast %6 : f32 to vector<2x8xf32>
    %36 = arith.addf %34, %35 : vector<2x8xf32>
    %cst_11 = arith.constant 0.000000e+00 : f32
    %37 = vector.broadcast %cst_11 : f32 to vector<2x8xf32>
    %38 = arith.maximumf %36, %37 : vector<2x8xf32>
    %39 = vector.extract_strided_slice %25 {offsets = [0, 0], sizes = [1, 8], strides = [1, 1]} : vector<2x8xf32> to vector<1x8xf32>
    %40 = vector.broadcast %7 : f32 to vector<1x8xf32>
    %41 = arith.mulf %40, %39 : vector<1x8xf32>
    %42 = vector.extract_strided_slice %25 {offsets = [1, 0], sizes = [1, 8], strides = [1, 1]} : vector<2x8xf32> to vector<1x8xf32>
    %43 = vector.broadcast %8 : f32 to vector<1x8xf32>
    %44 = arith.mulf %43, %42 : vector<1x8xf32>
    %45 = arith.addf %41, %44 : vector<1x8xf32>
    %46 = vector.broadcast %11 : f32 to vector<1x8xf32>
    %47 = arith.addf %45, %46 : vector<1x8xf32>
    %48 = arith.subf %47, %47 : vector<1x8xf32>
    %c0_12 = arith.constant 0 : index
    %c0_13 = arith.constant 0 : index
    %49 = vector.load %arg5[%c0_12, %c0_13] : memref<4x8xf32, #tpu.memory_space<vmem>>, vector<1x8xf32>
    tpu.vector_store %arg5[%c0_12, %c0_13], %48 {strides = array<i32>} : memref<4x8xf32, #tpu.memory_space<vmem>>, vector<1x8xf32>,
    %50 = vector.extract_strided_slice %38 {offsets = [0, 0], sizes = [1, 8], strides = [1, 1]} : vector<2x8xf32> to vector<1x8xf32>
    %51 = vector.broadcast %7 : f32 to vector<1x8xf32>
    %52 = arith.mulf %51, %50 : vector<1x8xf32>
    %53 = vector.extract_strided_slice %38 {offsets = [1, 0], sizes = [1, 8], strides = [1, 1]} : vector<2x8xf32> to vector<1x8xf32>
    %54 = vector.broadcast %8 : f32 to vector<1x8xf32>
    %55 = arith.mulf %54, %53 : vector<1x8xf32>
    %56 = arith.addf %52, %55 : vector<1x8xf32>
    %57 = vector.broadcast %11 : f32 to vector<1x8xf32>
    %58 = arith.addf %56, %57 : vector<1x8xf32>
    %59 = arith.subf %58, %58 : vector<1x8xf32>
    %c1_14 = arith.constant 1 : index
    %c0_15 = arith.constant 0 : index
    %60 = vector.load %arg5[%c1_14, %c0_15] : memref<4x8xf32, #tpu.memory_space<vmem>>, vector<1x8xf32>
    tpu.vector_store %arg5[%c1_14, %c0_15], %59 {strides = array<i32>} : memref<4x8xf32, #tpu.memory_space<vmem>>, vector<1x8xf32>,
    %61 = vector.extract_strided_slice %25 {offsets = [0, 0], sizes = [1, 8], strides = [1, 1]} : vector<2x8xf32> to vector<1x8xf32>
    %62 = vector.broadcast %9 : f32 to vector<1x8xf32>
    %63 = arith.mulf %62, %61 : vector<1x8xf32>
    %64 = vector.extract_strided_slice %25 {offsets = [1, 0], sizes = [1, 8], strides = [1, 1]} : vector<2x8xf32> to vector<1x8xf32>
    %65 = vector.broadcast %10 : f32 to vector<1x8xf32>
    %66 = arith.mulf %65, %64 : vector<1x8xf32>
    %67 = arith.addf %63, %66 : vector<1x8xf32>
    %68 = vector.broadcast %12 : f32 to vector<1x8xf32>
    %69 = arith.addf %67, %68 : vector<1x8xf32>
    %70 = arith.subf %69, %69 : vector<1x8xf32>
    %c2_16 = arith.constant 2 : index
    %c0_17 = arith.constant 0 : index
    %71 = vector.load %arg5[%c2_16, %c0_17] : memref<4x8xf32, #tpu.memory_space<vmem>>, vector<1x8xf32>
    tpu.vector_store %arg5[%c2_16, %c0_17], %70 {strides = array<i32>} : memref<4x8xf32, #tpu.memory_space<vmem>>, vector<1x8xf32>,
    %72 = vector.extract_strided_slice %38 {offsets = [0, 0], sizes = [1, 8], strides = [1, 1]} : vector<2x8xf32> to vector<1x8xf32>
    %73 = vector.broadcast %9 : f32 to vector<1x8xf32>
    %74 = arith.mulf %73, %72 : vector<1x8xf32>
    %75 = vector.extract_strided_slice %38 {offsets = [1, 0], sizes = [1, 8], strides = [1, 1]} : vector<2x8xf32> to vector<1x8xf32>
    %76 = vector.broadcast %10 : f32 to vector<1x8xf32>
    %77 = arith.mulf %76, %75 : vector<1x8xf32>
    %78 = arith.addf %74, %77 : vector<1x8xf32>
    %79 = vector.broadcast %12 : f32 to vector<1x8xf32>
    %80 = arith.addf %78, %79 : vector<1x8xf32>
    %81 = arith.subf %80, %80 : vector<1x8xf32>
    %c3_18 = arith.constant 3 : index
    %c0_19 = arith.constant 0 : index
    %82 = vector.load %arg5[%c3_18, %c0_19] : memref<4x8xf32, #tpu.memory_space<vmem>>, vector<1x8xf32>
    tpu.vector_store %arg5[%c3_18, %c0_19], %81 {strides = array<i32>} : memref<4x8xf32, #tpu.memory_space<vmem>>, vector<1x8xf32>,
    return
  }
}

</mosaic_0001>

<llo_original>
// kernel: model_forward.1
$region0: #{model_forward.1}
  #allocation0 [shape = 'u32[]', space=smem, size = 0x4, offset = 0x4, fixed_abs, tag = 'smem constant byte address 0x4 - core index']
  #allocation1 [shape = 'u32[144,128]{1,0:T(1,128)}', space=vmem, size = 0x12000, scoped, tag = 'internal scratch']
  %s0 = inlined_call_operand.hbm [shape: f32[2,2,8], index: 0, kind: input, shape index: {}]
  %s1 = inlined_call_operand.vmem [shape: f32[4], index: 1, kind: input, shape index: {}]
  %s2 = inlined_call_operand.vmem [shape: f32[2], index: 2, kind: input, shape index: {}]
  %s3 = inlined_call_operand.vmem [shape: f32[4], index: 3, kind: input, shape index: {}]
  %s4 = inlined_call_operand.vmem [shape: f32[2], index: 4, kind: input, shape index: {}]
  %s5 = inlined_call_operand.hbm [shape: f32[4,8], index: 5, kind: output, shape index: {}]
  %s6 = sld [smem:[#allocation0]]
  $region50: #{model_forward.1} parent=0
    _
  %s8 = ssub.s32 1, %s6
  %s9 = scalar_select 0, %s8, %s6
  $region1: #{model_forward.1} parent=0
    #allocation2 [shape = 'u8[2048]{0}', space=vmem, size = 0x800, scoped, tag = 'input window, operand 0, single buffered']
    #allocation3 [shape = 's32[1]{0}', space=sflag, size = 0x4, scoped, tag = 'scoped memory for model_forward.1']
    #allocation4 [shape = 's32[1]{0}', space=sflag, size = 0x4, scoped, tag = 'scoped memory for model_forward.1']
    #allocation5 [shape = 's32[1]{0}', space=sflag, size = 0x4, scoped, tag = 'scoped memory for model_forward.1']
    #allocation6 [shape = 'u8[512]{0}', space=smem, size = 0x200, scoped, tag = 'input window, operand 1, single buffered']
    #allocation7 [shape = 'u8[512]{0}', space=smem, size = 0x200, scoped, tag = 'input window, operand 2, single buffered']
    #allocation8 [shape = 's32[1]{0}', space=sflag, size = 0x4, scoped, tag = 'scoped memory for model_forward.1']
    #allocation9 [shape = 'u8[512]{0}', space=smem, size = 0x200, scoped, tag = 'input window, operand 3, single buffered']
    #allocation10 [shape = 'u8[512]{0}', space=smem, size = 0x200, scoped, tag = 'input window, operand 4, single buffered']
    #allocation11 [shape = 's32[1]{0}', space=sflag, size = 0x4, scoped, tag = 'scoped memory for model_forward.1']
    #allocation12 [shape = 'u8[2048]{0}', space=vmem, size = 0x800, scoped, tag = 'output window, operand 0, single buffered']
    %10 = vsyncpa [#allocation3], 0
    %11 = vsyncpa [#allocation5], 0
    %12 = vsyncpa [#allocation8], 0
    %13 = vsyncpa [#allocation11], 0
    %14 = vsyncpa [#allocation4], 0
    // Predicated region
    $region2: #{model_forward.1} parent=1 // pred_check
      _
    $region3: #{model_forward.1} parent=1 // pred_check_branch
      %16 = sbr.rel (0) target = $region5
    $region4: #{model_forward.1} parent=1 // pred_region
      %s18 = ssub.s32 64, 64
      %19 = vsyncadd [#allocation3], %s18
      %s20 = sshll.u32 [#allocation2], 4
      %s21 = int_to_ptr.vmem [resolvable:$true] %s20
      %26 = dma.hbm_to_vmem [thread:$0]  %s0, 64, %s21, [#allocation3], 32, 32, 2
    $region5: #{model_forward.1} parent=1 // pred_fallthru
      _
    // Predicated region
    $region6: #{model_forward.1} parent=1 // pred_check
      _
    $region7: #{model_forward.1} parent=1 // pred_check_branch
      %28 = sbr.rel (0) target = $region9
    $region8: #{model_forward.1} parent=1 // pred_region
      %s30 = ssub.s32 16, 16
      %31 = vsyncadd [#allocation5], %s30
      %s33 = sshll.u32 %s1, 4
      %s34 = int_to_ptr.vmem [resolvable:$true] %s33
      %36 = dma.vmem_to_smem %s34, 16, [#allocation6], [#allocation5]
    $region9: #{model_forward.1} parent=1 // pred_fallthru
      _
    // Predicated region
    $region10: #{model_forward.1} parent=1 // pred_check
      _
    $region11: #{model_forward.1} parent=1 // pred_check_branch
      %38 = sbr.rel (0) target = $region13
    $region12: #{model_forward.1} parent=1 // pred_region
      %s40 = ssub.s32 16, 16
      %41 = vsyncadd [#allocation8], %s40
      %s43 = sshll.u32 %s2, 4
      %s44 = int_to_ptr.vmem [resolvable:$true] %s43
      %46 = dma.vmem_to_smem %s44, 16, [#allocation7], [#allocation8]
    $region13: #{model_forward.1} parent=1 // pred_fallthru
      _
    // Predicated region
    $region14: #{model_forward.1} parent=1 // pred_check
      _
    $region15: #{model_forward.1} parent=1 // pred_check_branch
      %48 = sbr.rel (0) target = $region17
    $region16: #{model_forward.1} parent=1 // pred_region
      %s50 = ssub.s32 16, 16
      %51 = vsyncadd [#allocation8], %s50
      %s53 = sshll.u32 %s3, 4
      %s54 = int_to_ptr.vmem [resolvable:$true] %s53
      %56 = dma.vmem_to_smem %s54, 16, [#allocation9], [#allocation8]
    $region17: #{model_forward.1} parent=1 // pred_fallthru
      _
    // Predicated region
    $region18: #{model_forward.1} parent=1 // pred_check
      _
    $region19: #{model_forward.1} parent=1 // pred_check_branch
      %58 = sbr.rel (0) target = $region21
    $region20: #{model_forward.1} parent=1 // pred_region
      %s60 = ssub.s32 16, 16
      %61 = vsyncadd [#allocation11], %s60
      %s63 = sshll.u32 %s4, 4
      %s64 = int_to_ptr.vmem [resolvable:$true] %s63
      %66 = dma.vmem_to_smem %s64, 16, [#allocation10], [#allocation11]
    $region21: #{model_forward.1} parent=1 // pred_fallthru
      _
    // Predicated region
    $region22: #{model_forward.1} parent=1 // pred_check
      _
    $region23: #{model_forward.1} parent=1 // pred_check_branch
      %68 = sbr.rel (0) target = $region25
    $region24: #{model_forward.1} parent=1 // pred_region
      %69 = dma.done [#allocation3], 64
    $region25: #{model_forward.1} parent=1 // pred_fallthru
      _
    // Predicated region
    $region26: #{model_forward.1} parent=1 // pred_check
      _
    $region27: #{model_forward.1} parent=1 // pred_check_branch
      %71 = sbr.rel (0) target = $region29
    $region28: #{model_forward.1} parent=1 // pred_region
      %72 = dma.done [#allocation5], 16
    $region29: #{model_forward.1} parent=1 // pred_fallthru
      _
    // Predicated region
    $region30: #{model_forward.1} parent=1 // pred_check
      _
    $region31: #{model_forward.1} parent=1 // pred_check_branch
      %74 = sbr.rel (0) target = $region33
    $region32: #{model_forward.1} parent=1 // pred_region
      %75 = dma.done [#allocation8], 16
    $region33: #{model_forward.1} parent=1 // pred_fallthru
      _
    // Predicated region
    $region34: #{model_forward.1} parent=1 // pred_check
      _
    $region35: #{model_forward.1} parent=1 // pred_check_branch
      %77 = sbr.rel (0) target = $region37
    $region36: #{model_forward.1} parent=1 // pred_region
      %78 = dma.done [#allocation8], 16
    $region37: #{model_forward.1} parent=1 // pred_fallthru
      _
    // Predicated region
    $region38: #{model_forward.1} parent=1 // pred_check
      _
    $region39: #{model_forward.1} parent=1 // pred_check_branch
      %80 = sbr.rel (0) target = $region41
    $region40: #{model_forward.1} parent=1 // pred_region
      %81 = dma.done [#allocation11], 16
    $region41: #{model_forward.1} parent=1 // pred_fallthru
      _
    %82 = sfence
    %v83 = vld [vmem:[#allocation2] sm:$0x3]
    %v84 = vld [vmem:[#allocation2 + $0x2] sm:$0x3]
    %s85 = sld [smem:[#allocation6]]
    %s86 = sld [smem:[#allocation6 + $0x1]]
    %s87 = sld [smem:[#allocation6 + $0x2]]
    %s88 = sld [smem:[#allocation6 + $0x3]]
    %s89 = sld [smem:[#allocation7]]
    %s90 = sld [smem:[#allocation7 + $0x1]]
    %s91 = sld [smem:[#allocation9]]
    %s92 = sld [smem:[#allocation9 + $0x1]]
    %s93 = sld [smem:[#allocation9 + $0x2]]
    %s94 = sld [smem:[#allocation9 + $0x3]]
    %s95 = sld [smem:[#allocation10]]
    %s96 = sld [smem:[#allocation10 + $0x1]]
    %v97 = vstv %s85
    %v98 = vmul.f32 %v83, %v97
    %v99 = vmul.f32 %v84, %v97
    %v100 = vstv %s86
    %v101 = vmul.f32 %v83, %v100
    %v102 = vmul.f32 %v84, %v100
    %v105 = vrot.slane %v101, 1
    %v106 = vrot.slane %v102, 1
    %v109 = vadd.f32 %v98, %v105
    %v110 = vadd.f32 %v99, %v106
    %v111 = vstv %s89
    %v112 = vadd.f32 %v109, %v111
    %v113 = vadd.f32 %v110, %v111
    %v114 = vmax.f32 %v112, 0.0
    %v115 = vmax.f32 %v113, 0.0
    %v116 = vstv %s87
    %v117 = vmul.f32 %v83, %v116
    %v118 = vmul.f32 %v84, %v116
    %v119 = vstv %s88
    %v120 = vmul.f32 %v83, %v119
    %v121 = vmul.f32 %v84, %v119
    %v124 = vrot.slane %v120, 1
    %v125 = vrot.slane %v121, 1
    %v128 = vadd.f32 %v117, %v124
    %v129 = vadd.f32 %v118, %v125
    %v130 = vstv %s90
    %v131 = vadd.f32 %v128, %v130
    %v132 = vadd.f32 %v129, %v130
    %v133 = vmax.f32 %v131, 0.0
    %v134 = vmax.f32 %v132, 0.0
    %v135 = vstv %s91
    %v136 = vmul.f32 %v135, %v114
    %v137 = vstv %s92
    %v138 = vmul.f32 %v137, %v115
    %v139 = vadd.f32 %v136, %v138
    %v140 = vstv %s95
    %v141 = vadd.f32 %v139, %v140
    %v142 = vsub.f32 %v141, %v141
    %vm143 = vcmask 57344
    %144 = vst.msk [vmem:[#allocation12] sm:$0x1] %vm143, %v142
    %v145 = vmul.f32 %v135, %v133
    %v146 = vmul.f32 %v137, %v134
    %v147 = vadd.f32 %v145, %v146
    %v148 = vadd.f32 %v147, %v140
    %v149 = vsub.f32 %v148, %v148
    %150 = vst.msk [vmem:[#allocation12 + $0x1] sm:$0x1] %vm143, %v149
    %v151 = vstv %s93
    %v152 = vmul.f32 %v151, %v114
    %v153 = vstv %s94
    %v154 = vmul.f32 %v153, %v115
    %v155 = vadd.f32 %v152, %v154
    %v156 = vstv %s96
    %v157 = vadd.f32 %v155, %v156
    %v158 = vsub.f32 %v157, %v157
    %159 = vst.msk [vmem:[#allocation12 + $0x2] sm:$0x1] %vm143, %v158
    %v160 = vmul.f32 %v151, %v133
    %v161 = vmul.f32 %v153, %v134
    %v162 = vadd.f32 %v160, %v161
    %v163 = vadd.f32 %v162, %v156
    %v164 = vsub.f32 %v163, %v163
    %165 = vst.msk [vmem:[#allocation12 + $0x3] sm:$0x1] %vm143, %v164
    // Predicated region
    $region42: #{model_forward.1} parent=1 // pred_check
      _
    $region43: #{model_forward.1} parent=1 // pred_check_branch
      %167 = sbr.rel (0) target = $region45
    $region44: #{model_forward.1} parent=1 // pred_region
      %s169 = ssub.s32 64, 64
      %170 = vsyncadd [#allocation4], %s169
      %s172 = sshll.u32 [#allocation12], 4
      %s173 = int_to_ptr.vmem [resolvable:$true] %s172
      %175 = dma.vmem_to_hbm [thread:$0]  %s173, 64, %s5, [#allocation4]
    $region45: #{model_forward.1} parent=1 // pred_fallthru
      _
    // Predicated region
    $region46: #{model_forward.1} parent=1 // pred_check
      _
    $region47: #{model_forward.1} parent=1 // pred_check_branch
      %177 = sbr.rel (0) target = $region49
    $region48: #{model_forward.1} parent=1 // pred_region
      %178 = dma.done [#allocation4], 64
    $region49: #{model_forward.1} parent=1 // pred_fallthru
      _
    %179 = vsyncpa [#allocation3], 1
    %180 = vsyncpa [#allocation4], 1
    %181 = vsyncpa [#allocation5], 1
    %182 = vsyncpa [#allocation8], 1
    %183 = vsyncpa [#allocation11], 1

</llo_original>
